<compile_context>
chip_gen: v6e
topology: v6e:2x2x1
jax: 0.10.0
libtpu: 0.0.40
codegen_flags: <defaults>
</compile_context>

<pallas_src>
import math

import jax
import jax.numpy as jnp
from jax.experimental import pallas as pl
from jax.experimental.pallas import tpu as pltpu

_NEG_FILL = -10000.0  # matches torch masked_fill value


def _alignment_kernel(temp_ref, a_ref, b_ref, ma_ref, mb_ref, fa_ref, fb_ref):
    a = a_ref[...]                      # (bb, La, H)
    b = b_ref[...]                      # (bb, Lb, H)
    ma = ma_ref[...]                    # (bb, La, 1)  mask_a as a column
    mb = mb_ref[...]                    # (bb, 1, Lb)  mask_b as a lane-dense row
    temp = temp_ref[0]                  # scalar (SMEM)

    La = a.shape[1]

    a_f = a.astype(jnp.float32)
    b_f = b.astype(jnp.float32)

    # Scores: temperature folded into `a` (O(La*H)); contract the last dims of
    # both operands so no explicit b^T relayout is emitted.
    attn = jnp.einsum("bik,bjk->bij", a_f * temp, b_f,
                      preferred_element_type=jnp.float32)             # (bb, La, Lb)

    # mask = (mask_a @ mask_b^T) != 0  ==  broadcast compare (no outer matmul).
    valid = jnp.logical_and(ma != 0.0, mb != 0.0)                     # (bb, La, Lb)
    attn = jnp.where(valid, attn, jnp.float32(_NEG_FILL))

    # One shared exp for both softmaxes: softmax is shift-invariant, so a single
    # per-batch-element constant shift is exact for both axes.
    row_max = jnp.max(attn, axis=2, keepdims=True)                    # (bb, La, 1)
    m = jnp.max(row_max, axis=1, keepdims=True)                       # (bb, 1, 1)
    e = jnp.exp(attn - m)                                             # (bb, La, Lb)

    rowsum = jnp.sum(e, axis=2, keepdims=True)                        # (bb, La, 1) softmax dim=2
    colsum = jnp.sum(e, axis=1, keepdims=True)                        # (bb, 1, Lb) softmax dim=1

    # Fully-masked rows / columns: the reference (-10000 fill + per-axis max)
    # yields a uniform distribution there, while the shared-exp path underflows.
    # Detect them and substitute the exact uniform result.
    valid_f = valid.astype(jnp.float32)
    row_ok = jnp.max(valid_f, axis=2, keepdims=True) > 0.0            # (bb, La, 1)
    col_ok = jnp.max(valid_f, axis=1, keepdims=True) > 0.0            # (bb, 1, Lb)

    tiny = jnp.float32(1e-30)
    inv_row = pl.reciprocal(jnp.maximum(rowsum, tiny), approx=False)  # (bb, La, 1)
    inv_col = pl.reciprocal(jnp.maximum(colsum, tiny), approx=False)  # (bb, 1, Lb)

    # feature_a = softmax(attn, dim=2) @ b, normalization folded AFTER the matmul.
    eb = jnp.einsum("bij,bjh->bih", e.astype(b.dtype), b,
                    preferred_element_type=jnp.float32)               # (bb, La, H)
    mean_b = jnp.mean(b_f, axis=1, keepdims=True)                     # (bb, 1, H)
    fa_ref[...] = jnp.where(row_ok, eb * inv_row, mean_b).astype(fa_ref.dtype)

    # feature_b = softmax(attn, dim=1) @ a (uniform 1/La for fully-masked columns).
    attn_a = jnp.where(col_ok, e * inv_col, jnp.float32(1.0 / La))    # (bb, La, Lb)
    fb_ref[...] = jnp.einsum("bij,bjh->bih", attn_a.astype(a.dtype), a,
                             preferred_element_type=jnp.float32).astype(fb_ref.dtype)


def _pick_batch_block(B, La, Lb):
    """Batch elements per grid step: amortize per-step overhead at small L/H
    while keeping the (bb, La, Lb) f32 temporaries modest."""
    budget_elems = (2 * 1024 * 1024) // 4          # ~2 MiB of f32 score temporaries
    cap = max(1, budget_elems // max(1, La * Lb))
    cap = min(cap, 8, B)
    bb = 1
    for d in range(1, cap + 1):
        if B % d == 0:
            bb = d
    return bb


def alignment_forward(a, b, mask_a, mask_b, temperature):
    """a: (B, La, H), b: (B, Lb, H), mask_a: (B, La, 1), mask_b: (B, Lb, 1)."""
    B, La, H = a.shape
    _, Lb, _ = b.shape
    assert La == Lb, "as written in the PyTorch module, feature_b requires La == Lb"

    # mask_b transposed to (B, 1, Lb): L on the lane axis (lane-dense DMA) and
    # directly usable as a broadcast row; mask_a stays a (tiny) column.
    mask_a_col = mask_a.astype(jnp.float32)
    mask_b_row = jnp.swapaxes(mask_b.astype(jnp.float32), 1, 2)

    temp = jnp.asarray([temperature], dtype=jnp.float32)

    bb = _pick_batch_block(B, La, Lb)
    grid = (B // bb,)

    # Rough per-step VMEM footprint; raise the scoped limit only when needed.
    # TODO(synk): add an La/Lb tiling grid axis (two-pass column softmax) for
    # sequence lengths where a single (La, Lb) f32 tile no longer fits VMEM.
    itemsize = jnp.dtype(a.dtype).itemsize
    io_bytes = 2 * 2 * (2 * bb * La * H * itemsize)   # double-buffered a,b + fa,fb
    tmp_bytes = 3 * bb * La * Lb * 4                   # attn/e/attn_a f32 temporaries
    est = io_bytes + tmp_bytes
    cp = dict(dimension_semantics=("parallel",))
    if est > 32 * 1024 * 1024:
        cp["vmem_limit_bytes"] = min(int(est * 3 // 2), 100 * 1024 * 1024)

    fa, fb = pl.pallas_call(
        _alignment_kernel,
        out_shape=(
            jax.ShapeDtypeStruct((B, La, H), a.dtype),
            jax.ShapeDtypeStruct((B, La, H), a.dtype),
        ),
        grid_spec=pltpu.PrefetchScalarGridSpec(
            num_scalar_prefetch=0,
            grid=grid,
            in_specs=[
                pl.BlockSpec(memory_space=pltpu.MemorySpace.SMEM),    # temperature
                pl.BlockSpec((bb, La, H), lambda i: (i, 0, 0)),       # a
                pl.BlockSpec((bb, Lb, H), lambda i: (i, 0, 0)),       # b
                pl.BlockSpec((bb, La, 1), lambda i: (i, 0, 0)),       # mask_a (column)
                pl.BlockSpec((bb, 1, Lb), lambda i: (i, 0, 0)),       # mask_b (row)
            ],
            out_specs=[
                pl.BlockSpec((bb, La, H), lambda i: (i, 0, 0)),       # feature_a
                pl.BlockSpec((bb, La, H), lambda i: (i, 0, 0)),       # feature_b
            ],
        ),
        compiler_params=pltpu.CompilerParams(**cp),
    )(temp, a, b, mask_a_col, mask_b_row)
    return fa, fb


def _reference(a, b, mask_a, mask_b, temperature):
    attn = jnp.einsum("bik,bjk->bij", a, b) * temperature
    mask = jnp.einsum("bik,bjk->bij", mask_a, mask_b) != 0.0
    attn = jnp.where(mask, attn, _NEG_FILL)
    attn_a = jax.nn.softmax(attn, axis=1)
    attn_b = jax.nn.softmax(attn, axis=2)
    feature_a = jnp.einsum("bij,bjh->bih", attn_b, b)
    feature_b = jnp.einsum("bij,bjh->bih", attn_a, a)
    return feature_a, feature_b


if __name__ == "__main__":
    B, L, H = 2, 8, 32   # batch, seq (La == Lb), hidden_size

    key = jax.random.PRNGKey(0)
    ka, kb = jax.random.split(key)
    a = jax.random.normal(ka, (B, L, H), dtype=jnp.float32)
    b = jax.random.normal(kb, (B, L, H), dtype=jnp.float32)

    # masks: 0/1 floats, pad out the tail of each sequence (includes fully masked
    # rows/columns to exercise the degenerate-softmax path)
    mask_a = jnp.ones((B, L, 1), dtype=jnp.float32).at[0, -2:, 0].set(0.0)
    mask_b = jnp.ones((B, L, 1), dtype=jnp.float32).at[1, -3:, 0].set(0.0)

    # nn.Parameter(torch.tensor(1 / sqrt(hidden_size))) — deterministic init
    temperature = 1.0 / math.sqrt(H)

    fa, fb = alignment_forward(a, b, mask_a, mask_b, temperature)
    jax.block_until_ready((fa, fb))

    ref_fa, ref_fb = _reference(a, b, mask_a, mask_b, temperature)
    assert jnp.allclose(fa, ref_fa, atol=1e-5, rtol=1e-5)
    assert jnp.allclose(fb, ref_fb, atol=1e-5, rtol=1e-5)

    print("KERNEL_OK")
</pallas_src>

<mosaic_0001>
module attributes {stable_mosaic.version = 11 : i64} {
  func.func @_alignment_kernel(%arg0: i32, %arg1: memref<1xf32, #tpu.memory_space<smem>>, %arg2: memref<2x8x32xf32, #tpu.memory_space<vmem>>, %arg3: memref<2x8x32xf32, #tpu.memory_space<vmem>>, %arg4: memref<2x8x1xf32, #tpu.memory_space<vmem>>, %arg5: memref<2x1x8xf32, #tpu.memory_space<vmem>>, %arg6: memref<2x8x32xf32, #tpu.memory_space<vmem>>, %arg7: memref<2x8x32xf32, #tpu.memory_space<vmem>>) attributes {dimension_semantics = [#tpu.dimension_semantics<parallel>], iteration_bounds = array<i64: 1>, scalar_prefetch = 0 : i64, scratch_operands = 0 : i64, tpu.core_type = #tpu.core_type<tc>, window_params = [{transform_indices = @transform_0, window_bounds = array<i64: 1>}, {transform_indices = @transform_1, window_bounds = array<i64: 2, 8, 32>}, {transform_indices = @transform_2, window_bounds = array<i64: 2, 8, 32>}, {transform_indices = @transform_3, window_bounds = array<i64: 2, 8, 1>}, {transform_indices = @transform_4, window_bounds = array<i64: 2, 1, 8>}, {transform_indices = @transform_5, window_bounds = array<i64: 2, 8, 32>}, {transform_indices = @transform_6, window_bounds = array<i64: 2, 8, 32>}]} {
    %c0 = arith.constant 0 : index
    %c0_0 = arith.constant 0 : index
    %c0_1 = arith.constant 0 : index
    %0 = vector.load %arg2[%c0, %c0_0, %c0_1] : memref<2x8x32xf32, #tpu.memory_space<vmem>>, vector<2x8x32xf32>
    %c0_2 = arith.constant 0 : index
    %c0_3 = arith.constant 0 : index
    %c0_4 = arith.constant 0 : index
    %1 = vector.load %arg3[%c0_2, %c0_3, %c0_4] : memref<2x8x32xf32, #tpu.memory_space<vmem>>, vector<2x8x32xf32>
    %c0_5 = arith.constant 0 : index
    %c0_6 = arith.constant 0 : index
    %c0_7 = arith.constant 0 : index
    %2 = vector.load %arg4[%c0_5, %c0_6, %c0_7] : memref<2x8x1xf32, #tpu.memory_space<vmem>>, vector<2x8x1xf32>
    %c0_8 = arith.constant 0 : index
    %c0_9 = arith.constant 0 : index
    %c0_10 = arith.constant 0 : index
    %3 = vector.load %arg5[%c0_8, %c0_9, %c0_10] : memref<2x1x8xf32, #tpu.memory_space<vmem>>, vector<2x1x8xf32>
    %c0_11 = arith.constant 0 : index
    %4 = memref.load %arg1[%c0_11] : memref<1xf32, #tpu.memory_space<smem>>
    %5 = vector.broadcast %4 : f32 to vector<2x8x32xf32>
    %6 = arith.mulf %0, %5 : vector<2x8x32xf32>
    "tpu.trace_start"() <{level = 10 : i32, message = "bik,bjk->bij"}> : () -> ()
    %cst = arith.constant dense<0.000000e+00> : vector<2x8x8xf32>
    %7 = tpu.matmul %6, %1, %cst {dimension_numbers = #tpu.dot_dimension_numbers<[2], [2], [1], [1], [0, 0, 0, 1, 1, 1], [0], [0]>} : vector<2x8x32xf32>, vector<2x8x32xf32>, vector<2x8x8xf32> -> vector<2x8x8xf32>
    %cst_12 = arith.constant 0.000000e+00 : f32
    "tpu.trace_stop"() : () -> ()
    %8 = vector.broadcast %cst_12 : f32 to vector<2x8x1xf32>
    %9 = arith.cmpf one, %2, %8 : vector<2x8x1xf32>
    %cst_13 = arith.constant 0.000000e+00 : f32
    %10 = vector.broadcast %cst_13 : f32 to vector<2x1x8xf32>
    %11 = arith.cmpf one, %3, %10 : vector<2x1x8xf32>
    %12 = vector.broadcast %9 : vector<2x8x1xi1> to vector<2x8x8xi1>
    %13 = vector.broadcast %11 : vector<2x1x8xi1> to vector<2x8x8xi1>
    %14 = arith.andi %12, %13 : vector<2x8x8xi1>
    %cst_14 = arith.constant -1.000000e+04 : f32
    %15 = vector.broadcast %cst_14 : f32 to vector<2x8x8xf32>
    %16 = arith.select %14, %7, %15 : vector<2x8x8xi1>, vector<2x8x8xf32>
    %cst_15 = arith.constant dense<0xFF800000> : vector<2x8xf32>
    %17 = vector.multi_reduction <maximumf>, %16, %cst_15 [2] : vector<2x8x8xf32> to vector<2x8xf32>
    %18 = vector.shape_cast %17 : vector<2x8xf32> to vector<2x8x1xf32>
    %cst_16 = arith.constant dense<0xFF800000> : vector<2x1xf32>
    %19 = vector.multi_reduction <maximumf>, %18, %cst_16 [1] : vector<2x8x1xf32> to vector<2x1xf32>
    %20 = vector.shape_cast %19 : vector<2x1xf32> to vector<2x1x1xf32>
    %21 = vector.broadcast %20 : vector<2x1x1xf32> to vector<2x8x8xf32>
    %22 = arith.subf %16, %21 : vector<2x8x8xf32>
    %23 = math.exp %22 : vector<2x8x8xf32>
    %cst_17 = arith.constant dense<0.000000e+00> : vector<2x8xf32>
    %24 = vector.multi_reduction <add>, %23, %cst_17 [2] : vector<2x8x8xf32> to vector<2x8xf32>
    %25 = vector.shape_cast %24 : vector<2x8xf32> to vector<2x8x1xf32>
    %cst_18 = arith.constant dense<0.000000e+00> : vector<2x8xf32>
    %26 = vector.multi_reduction <add>, %23, %cst_18 [1] : vector<2x8x8xf32> to vector<2x8xf32>
    %27 = vector.shape_cast %26 : vector<2x8xf32> to vector<2x1x8xf32>
    %28 = arith.extui %14 : vector<2x8x8xi1> to vector<2x8x8xi32>
    %29 = arith.sitofp %28 : vector<2x8x8xi32> to vector<2x8x8xf32>
    %cst_19 = arith.constant dense<0xFF800000> : vector<2x8xf32>
    %30 = vector.multi_reduction <maximumf>, %29, %cst_19 [2] : vector<2x8x8xf32> to vector<2x8xf32>
    %31 = vector.shape_cast %30 : vector<2x8xf32> to vector<2x8x1xf32>
    %cst_20 = arith.constant 0.000000e+00 : f32
    %32 = vector.broadcast %cst_20 : f32 to vector<2x8x1xf32>
    %33 = arith.cmpf ogt, %31, %32 : vector<2x8x1xf32>
    %cst_21 = arith.constant dense<0xFF800000> : vector<2x8xf32>
    %34 = vector.multi_reduction <maximumf>, %29, %cst_21 [1] : vector<2x8x8xf32> to vector<2x8xf32>
    %35 = vector.shape_cast %34 : vector<2x8xf32> to vector<2x1x8xf32>
    %cst_22 = arith.constant 0.000000e+00 : f32
    %36 = vector.broadcast %cst_22 : f32 to vector<2x1x8xf32>
    %37 = arith.cmpf ogt, %35, %36 : vector<2x1x8xf32>
    %cst_23 = arith.constant 1.000000e-30 : f32
    %38 = vector.broadcast %cst_23 : f32 to vector<2x8x1xf32>
    %39 = arith.maximumf %25, %38 : vector<2x8x1xf32>
    %40 = tpu.reciprocal %39 : vector<2x8x1xf32> -> vector<2x8x1xf32>
    %cst_24 = arith.constant 1.000000e-30 : f32
    %41 = vector.broadcast %cst_24 : f32 to vector<2x1x8xf32>
    %42 = arith.maximumf %27, %41 : vector<2x1x8xf32>
    %43 = tpu.reciprocal %42 : vector<2x1x8xf32> -> vector<2x1x8xf32>
    "tpu.trace_start"() <{level = 10 : i32, message = "bij,bjh->bih"}> : () -> ()
    %cst_25 = arith.constant dense<0.000000e+00> : vector<2x8x32xf32>
    %44 = tpu.matmul %23, %1, %cst_25 {dimension_numbers = #tpu.dot_dimension_numbers<[2], [1], [1], [2], [0, 0, 0, 1, 1, 2], [0], [0]>} : vector<2x8x8xf32>, vector<2x8x32xf32>, vector<2x8x32xf32> -> vector<2x8x32xf32>
    "tpu.trace_stop"() : () -> ()
    %cst_26 = arith.constant dense<0.000000e+00> : vector<2x32xf32>
    %45 = vector.multi_reduction <add>, %1, %cst_26 [1] : vector<2x8x32xf32> to vector<2x32xf32>
    %46 = vector.shape_cast %45 : vector<2x32xf32> to vector<2x1x32xf32>
    %cst_27 = arith.constant 8.000000e+00 : f32
    %47 = vector.broadcast %cst_27 : f32 to vector<2x1x32xf32>
    %48 = arith.divf %46, %47 : vector<2x1x32xf32>
    %49 = vector.broadcast %40 : vector<2x8x1xf32> to vector<2x8x32xf32>
    %50 = arith.mulf %44, %49 : vector<2x8x32xf32>
    %51 = vector.shape_cast %33 : vector<2x8x1xi1> to vector<2x8x1xi1>
    %52 = vector.broadcast %51 : vector<2x8x1xi1> to vector<2x8x32xi1>
    %53 = vector.shape_cast %48 : vector<2x1x32xf32> to vector<2x1x32xf32>
    %54 = vector.broadcast %53 : vector<2x1x32xf32> to vector<2x8x32xf32>
    %55 = arith.select %52, %50, %54 : vector<2x8x32xi1>, vector<2x8x32xf32>
    %c0_28 = arith.constant 0 : index
    %c0_29 = arith.constant 0 : index
    %c0_30 = arith.constant 0 : index
    %56 = vector.load %arg6[%c0_28, %c0_29, %c0_30] : memref<2x8x32xf32, #tpu.memory_space<vmem>>, vector<2x8x32xf32>
    tpu.vector_store %arg6[%c0_28, %c0_29, %c0_30], %55 {strides = array<i32>} : memref<2x8x32xf32, #tpu.memory_space<vmem>>, vector<2x8x32xf32>,
    %57 = vector.broadcast %43 : vector<2x1x8xf32> to vector<2x8x8xf32>
    %58 = arith.mulf %23, %57 : vector<2x8x8xf32>
    %cst_31 = arith.constant 1.250000e-01 : f32
    %59 = vector.shape_cast %37 : vector<2x1x8xi1> to vector<2x1x8xi1>
    %60 = vector.broadcast %59 : vector<2x1x8xi1> to vector<2x8x8xi1>
    %61 = vector.broadcast %cst_31 : f32 to vector<2x8x8xf32>
    %62 = arith.select %60, %58, %61 : vector<2x8x8xi1>, vector<2x8x8xf32>
    "tpu.trace_start"() <{level = 10 : i32, message = "bij,bjh->bih"}> : () -> ()
    %cst_32 = arith.constant dense<0.000000e+00> : vector<2x8x32xf32>
    %63 = tpu.matmul %62, %0, %cst_32 {dimension_numbers = #tpu.dot_dimension_numbers<[2], [1], [1], [2], [0, 0, 0, 1, 1, 2], [0], [0]>} : vector<2x8x8xf32>, vector<2x8x32xf32>, vector<2x8x32xf32> -> vector<2x8x32xf32>
    "tpu.trace_stop"() : () -> ()
    %c0_33 = arith.constant 0 : index
    %c0_34 = arith.constant 0 : index
    %c0_35 = arith.constant 0 : index
    %64 = vector.load %arg7[%c0_33, %c0_34, %c0_35] : memref<2x8x32xf32, #tpu.memory_space<vmem>>, vector<2x8x32xf32>
    tpu.vector_store %arg7[%c0_33, %c0_34, %c0_35], %63 {strides = array<i32>} : memref<2x8x32xf32, #tpu.memory_space<vmem>>, vector<2x8x32xf32>,
    return
  }
  func.func @transform_0(%arg0: i32) -> i32 {
    %c0_i32 = arith.constant 0 : i32
    %c0_i32_0 = arith.constant 0 : i32
    return %c0_i32 : i32
  }
  func.func @transform_1(%arg0: i32) -> (i32, i32, i32) {
    %c0_i32 = arith.constant 0 : i32
    %c0_i32_0 = arith.constant 0 : i32
    %c0_i32_1 = arith.constant 0 : i32
    return %arg0, %c0_i32, %c0_i32_0 : i32, i32, i32
  }
  func.func @transform_2(%arg0: i32) -> (i32, i32, i32) {
    %c0_i32 = arith.constant 0 : i32
    %c0_i32_0 = arith.constant 0 : i32
    %c0_i32_1 = arith.constant 0 : i32
    return %arg0, %c0_i32, %c0_i32_0 : i32, i32, i32
  }
  func.func @transform_3(%arg0: i32) -> (i32, i32, i32) {
    %c0_i32 = arith.constant 0 : i32
    %c0_i32_0 = arith.constant 0 : i32
    %c0_i32_1 = arith.constant 0 : i32
    return %arg0, %c0_i32, %c0_i32_0 : i32, i32, i32
  }
  func.func @transform_4(%arg0: i32) -> (i32, i32, i32) {
    %c0_i32 = arith.constant 0 : i32
    %c0_i32_0 = arith.constant 0 : i32
    %c0_i32_1 = arith.constant 0 : i32
    return %arg0, %c0_i32, %c0_i32_0 : i32, i32, i32
  }
  func.func @transform_5(%arg0: i32) -> (i32, i32, i32) {
    %c0_i32 = arith.constant 0 : i32
    %c0_i32_0 = arith.constant 0 : i32
    %c0_i32_1 = arith.constant 0 : i32
    return %arg0, %c0_i32, %c0_i32_0 : i32, i32, i32
  }
  func.func @transform_6(%arg0: i32) -> (i32, i32, i32) {
    %c0_i32 = arith.constant 0 : i32
    %c0_i32_0 = arith.constant 0 : i32
    %c0_i32_1 = arith.constant 0 : i32
    return %arg0, %c0_i32, %c0_i32_0 : i32, i32, i32
  }
}

</mosaic_0001>

<llo_original>
// kernel: tpu_custom_call.1
$region0: #{tpu_custom_call.1}
  #allocation0 [shape = 'u32[]', space=smem, size = 0x4, offset = 0x4, fixed_abs, tag = 'smem constant byte address 0x4 - core index']
  #allocation1 [shape = 'u32[144,128]{1,0:T(1,128)}', space=vmem, size = 0x12000, scoped, tag = 'internal scratch']
  #allocation2 [shape = 'f32[1]{0:T(128)S(6)}', space=smem, size = 0x200, scoped, tag = 'scoped memory for tpu_custom_call.1']
  %s0 = inlined_call_operand.<no memory space> [shape: f32[1], index: 0, kind: input, shape index: {}]
  %s1 = inlined_call_operand.vmem [shape: f32[2,8,32], index: 1, kind: input, shape index: {}]
  %s2 = inlined_call_operand.hbm [shape: f32[2,8,32], index: 2, kind: input, shape index: {}]
  %s3 = inlined_call_operand.vmem [shape: f32[2,8,1], index: 3, kind: input, shape index: {}]
  %s4 = inlined_call_operand.vmem [shape: f32[2,1,8], index: 4, kind: input, shape index: {}]
  %s5 = inlined_call_operand.hbm [shape: f32[2,8,32], index: 5, kind: output, shape index: {0}]
  %s6 = inlined_call_operand.hbm [shape: f32[2,8,32], index: 6, kind: output, shape index: {1}]
  %7 = xla_tuple %s5, %s6
  %s8 = sld [smem:[#allocation0]]
  $region42: #{tpu_custom_call.1} parent=0
    _
  %s10 = ssub.s32 1, %s8
  %s11 = scalar_select 0, %s10, %s8
  %12 = sst [smem:[#allocation2]] %s0
  $region1: #{tpu_custom_call.1} parent=0
    #allocation3 [shape = 'u8[8192]{0}', space=vmem, size = 0x2000, scoped, tag = 'input window, operand 2, single buffered']
    #allocation4 [shape = 's32[1]{0}', space=sflag, size = 0x4, scoped, tag = 'scoped memory for tpu_custom_call.1']
    #allocation5 [shape = 's32[1]{0}', space=sflag, size = 0x4, scoped, tag = 'scoped memory for tpu_custom_call.1']
    #allocation6 [shape = 'u8[8192]{0}', space=vmem, size = 0x2000, scoped, tag = 'output window, operand 0, single buffered']
    #allocation7 [shape = 'u8[8192]{0}', space=vmem, size = 0x2000, scoped, tag = 'output window, operand 1, single buffered']
    #allocation8 [shape = 's32[1]{0}', space=sflag, size = 0x4, scoped, tag = 'scoped memory for tpu_custom_call.1']
    %13 = vsyncpa [#allocation4], 0
    %14 = vsyncpa [#allocation5], 0
    %15 = vsyncpa [#allocation8], 0
    // Predicated region
    $region2: #{tpu_custom_call.1} parent=1 // pred_check
      _
    $region3: #{tpu_custom_call.1} parent=1 // pred_check_branch
      %17 = sbr.rel (0) target = $region5
    $region4: #{tpu_custom_call.1} parent=1 // pred_region
      _
    $region5: #{tpu_custom_call.1} parent=1 // pred_fallthru
      _
    // Predicated region
    $region6: #{tpu_custom_call.1} parent=1 // pred_check
      _
    $region7: #{tpu_custom_call.1} parent=1 // pred_check_branch
      %19 = sbr.rel (0) target = $region9
    $region8: #{tpu_custom_call.1} parent=1 // pred_region
      _
    $region9: #{tpu_custom_call.1} parent=1 // pred_fallthru
      _
    // Predicated region
    $region10: #{tpu_custom_call.1} parent=1 // pred_check
      _
    $region11: #{tpu_custom_call.1} parent=1 // pred_check_branch
      %21 = sbr.rel (0) target = $region13
    $region12: #{tpu_custom_call.1} parent=1 // pred_region
      %s23 = ssub.s32 256, 256
      %24 = vsyncadd [#allocation4], %s23
      %s25 = sshll.u32 [#allocation3], 4
      %s26 = int_to_ptr.vmem [resolvable:$true] %s25
      %31 = dma.hbm_to_vmem [thread:$0]  %s2, 256, %s26, [#allocation4], 128, 128, 8
    $region13: #{tpu_custom_call.1} parent=1 // pred_fallthru
      _
    // Predicated region
    $region14: #{tpu_custom_call.1} parent=1 // pred_check
      _
    $region15: #{tpu_custom_call.1} parent=1 // pred_check_branch
      %33 = sbr.rel (0) target = $region17
    $region16: #{tpu_custom_call.1} parent=1 // pred_region
      _
    $region17: #{tpu_custom_call.1} parent=1 // pred_fallthru
      _
    // Predicated region
    $region18: #{tpu_custom_call.1} parent=1 // pred_check
      _
    $region19: #{tpu_custom_call.1} parent=1 // pred_check_branch
      %35 = sbr.rel (0) target = $region21
    $region20: #{tpu_custom_call.1} parent=1 // pred_region
      _
    $region21: #{tpu_custom_call.1} parent=1 // pred_fallthru
      _
    // Predicated region
    $region22: #{tpu_custom_call.1} parent=1 // pred_check
      _
    $region23: #{tpu_custom_call.1} parent=1 // pred_check_branch
      %37 = sbr.rel (0) target = $region25
    $region24: #{tpu_custom_call.1} parent=1 // pred_region
      %38 = dma.done [#allocation4], 256
    $region25: #{tpu_custom_call.1} parent=1 // pred_fallthru
      _
    %v39 = vld [vmem:[%s1] sm:$0xff]
    %v40 = vld [vmem:[%s1 + $0x8] sm:$0xff]
    %v41 = vld [vmem:[#allocation3] sm:$0xff]
    %v42 = vld [vmem:[#allocation3 + $0x8] sm:$0xff]
    %v43 = vld [vmem:[%s3] sm:$0xff]
    %v44 = vld [vmem:[%s3 + $0x8] sm:$0xff]
    %v45 = vld [vmem:[%s4] sm:$0x1]
    %v46 = vld [vmem:[%s4 + $0x1] sm:$0x1]
    %s47 = sld [smem:[#allocation2]]
    %v48 = vstv %s47
    %v49 = vmul.f32 %v39, %v48
    %v50 = vmul.f32 %v40, %v48
    %vm51 = vcmask 261120
    %v53 = vsel %vm51, %v49, 0
    %v56 = vsel %vm51, %v41, 0
    %58 = vmatprep.subr.mxu0 0.0
    %59 = vmatpush1.xpose.msra.mxu0 0.0
    %60 = vmatprep.subr.mxu0 0.0
    %61 = vmatpush1.xpose.msra.mxu0 0.0
    %62 = vmatprep.subr.mxu0 0.0
    %63 = vmatpush1.xpose.msra.mxu0 0.0
    %64 = vmatprep.subr.mxu0 0.0
    %65 = vmatpush1.xpose.msra.mxu0 0.0
    %66 = vmatprep.subr.mxu0 0.0
    %67 = vmatpush1.xpose.msra.mxu0 0.0
    %68 = vmatprep.subr.mxu0 0.0
    %69 = vmatpush1.xpose.msra.mxu0 0.0
    %70 = vmatprep.subr.mxu0 0.0
    %71 = vmatpush1.xpose.msra.mxu0 0.0
    %72 = vmatprep.subr.mxu0 0.0
    %73 = vmatpush1.xpose.msra.mxu0 0.0
    %74 = vmatprep.subr.mxu0 0.0
    %75 = vmatpush1.xpose.msra.mxu0 0.0
    %76 = vmatprep.subr.mxu0 0.0
    %77 = vmatpush1.xpose.msra.mxu0 0.0
    %78 = vmatprep.subr.mxu0 0.0
    %79 = vmatpush1.xpose.msra.mxu0 0.0
    %80 = vmatprep.subr.mxu0 0.0
    %81 = vmatpush1.xpose.msra.mxu0 0.0
    %82 = vmatprep.subr.mxu0 0.0
    %83 = vmatpush1.xpose.msra.mxu0 0.0
    %84 = vmatprep.subr.mxu0 0.0
    %85 = vmatpush1.xpose.msra.mxu0 0.0
    %86 = vmatprep.subr.mxu0 0.0
    %87 = vmatpush1.xpose.msra.mxu0 0.0
    %88 = vmatprep.subr.mxu0 0.0
    %89 = vmatpush1.xpose.msra.mxu0 %v56
    %90 = vmatprep.subr.mxu0 0.0
    %91 = vmatpush2.xpose.msra.mxu0 0.0
    %92 = vmatprep.subr.mxu0 0.0
    %93 = vmatpush2.xpose.msra.mxu0 0.0
    %94 = vmatprep.subr.mxu0 0.0
    %95 = vmatpush2.xpose.msra.mxu0 0.0
    %96 = vmatprep.subr.mxu0 0.0
    %97 = vmatpush2.xpose.msra.mxu0 0.0
    %98 = vmatprep.subr.mxu0 0.0
    %99 = vmatpush2.xpose.msra.mxu0 0.0
    %100 = vmatprep.subr.mxu0 0.0
    %101 = vmatpush2.xpose.msra.mxu0 0.0
    %102 = vmatprep.subr.mxu0 0.0
    %103 = vmatpush2.xpose.msra.mxu0 0.0
    %104 = vmatprep.subr.mxu0 0.0
    %105 = vmatpush2.xpose.msra.mxu0 0.0
    %106 = vmatprep.subr.mxu0 0.0
    %107 = vmatpush2.xpose.msra.mxu0 0.0
    %108 = vmatprep.subr.mxu0 0.0
    %109 = vmatpush2.xpose.msra.mxu0 0.0
    %110 = vmatprep.subr.mxu0 0.0
    %111 = vmatpush2.xpose.msra.mxu0 0.0
    %112 = vmatprep.subr.mxu0 0.0
    %113 = vmatpush2.xpose.msra.mxu0 0.0
    %114 = vmatprep.subr.mxu0 0.0
    %115 = vmatpush2.xpose.msra.mxu0 0.0
    %116 = vmatprep.subr.mxu0 0.0
    %117 = vmatpush2.xpose.msra.mxu0 0.0
    %118 = vmatprep.subr.mxu0 0.0
    %119 = vmatpush2.xpose.msra.mxu0 0.0
    %120 = vmatprep.subr.mxu0 0.0
    %121 = vmatpush2.xpose.msra.mxu0 0.0
    %122 = vmatprep.mubr.f32.mxu0 0.0
    %123 = vmatmul.mubr.f32.gmra.mxu0 %v53
    %v124 = vpop.f32.mrf.mxu0
    %v125 = vadd.f32 0.0, %v124
    %v126 = vpop.f32.mrf.mxu0
    %127 = vdwg.mxu0
    %v129 = vsel %vm51, %v50, 0
    %v132 = vsel %vm51, %v42, 0
    %134 = vmatprep.subr.mxu0 0.0
    %135 = vmatpush1.xpose.msra.mxu0 0.0
    %136 = vmatprep.subr.mxu0 0.0
    %137 = vmatpush1.xpose.msra.mxu0 0.0
    %138 = vmatprep.subr.mxu0 0.0
    %139 = vmatpush1.xpose.msra.mxu0 0.0
    %140 = vmatprep.subr.mxu0 0.0
    %141 = vmatpush1.xpose.msra.mxu0 0.0
    %142 = vmatprep.subr.mxu0 0.0
    %143 = vmatpush1.xpose.msra.mxu0 0.0
    %144 = vmatprep.subr.mxu0 0.0
    %145 = vmatpush1.xpose.msra.mxu0 0.0
    %146 = vmatprep.subr.mxu0 0.0
    %147 = vmatpush1.xpose.msra.mxu0 0.0
    %148 = vmatprep.subr.mxu0 0.0
    %149 = vmatpush1.xpose.msra.mxu0 0.0
    %150 = vmatprep.subr.mxu0 0.0
    %151 = vmatpush1.xpose.msra.mxu0 0.0
    %152 = vmatprep.subr.mxu0 0.0
    %153 = vmatpush1.xpose.msra.mxu0 0.0
    %154 = vmatprep.subr.mxu0 0.0
    %155 = vmatpush1.xpose.msra.mxu0 0.0
    %156 = vmatprep.subr.mxu0 0.0
    %157 = vmatpush1.xpose.msra.mxu0 0.0
    %158 = vmatprep.subr.mxu0 0.0
    %159 = vmatpush1.xpose.msra.mxu0 0.0
    %160 = vmatprep.subr.mxu0 0.0
    %161 = vmatpush1.xpose.msra.mxu0 0.0
    %162 = vmatprep.subr.mxu0 0.0
    %163 = vmatpush1.xpose.msra.mxu0 0.0
    %164 = vmatprep.subr.mxu0 0.0
    %165 = vmatpush1.xpose.msra.mxu0 %v132
    %166 = vmatprep.subr.mxu0 0.0
    %167 = vmatpush2.xpose.msra.mxu0 0.0
    %168 = vmatprep.subr.mxu0 0.0
    %169 = vmatpush2.xpose.msra.mxu0 0.0
    %170 = vmatprep.subr.mxu0 0.0
    %171 = vmatpush2.xpose.msra.mxu0 0.0
    %172 = vmatprep.subr.mxu0 0.0
    %173 = vmatpush2.xpose.msra.mxu0 0.0
    %174 = vmatprep.subr.mxu0 0.0
    %175 = vmatpush2.xpose.msra.mxu0 0.0
    %176 = vmatprep.subr.mxu0 0.0
    %177 = vmatpush2.xpose.msra.mxu0 0.0
    %178 = vmatprep.subr.mxu0 0.0
    %179 = vmatpush2.xpose.msra.mxu0 0.0
    %180 = vmatprep.subr.mxu0 0.0
    %181 = vmatpush2.xpose.msra.mxu0 0.0
    %182 = vmatprep.subr.mxu0 0.0
    %183 = vmatpush2.xpose.msra.mxu0 0.0
    %184 = vmatprep.subr.mxu0 0.0
    %185 = vmatpush2.xpose.msra.mxu0 0.0
    %186 = vmatprep.subr.mxu0 0.0
    %187 = vmatpush2.xpose.msra.mxu0 0.0
    %188 = vmatprep.subr.mxu0 0.0
    %189 = vmatpush2.xpose.msra.mxu0 0.0
    %190 = vmatprep.subr.mxu0 0.0
    %191 = vmatpush2.xpose.msra.mxu0 0.0
    %192 = vmatprep.subr.mxu0 0.0
    %193 = vmatpush2.xpose.msra.mxu0 0.0
    %194 = vmatprep.subr.mxu0 0.0
    %195 = vmatpush2.xpose.msra.mxu0 0.0
    %196 = vmatprep.subr.mxu0 0.0
    %197 = vmatpush2.xpose.msra.mxu0 0.0
    %198 = vmatprep.mubr.f32.mxu0 0.0
    %199 = vmatmul.mubr.f32.gmra.mxu0 %v129
    %v200 = vpop.f32.mrf.mxu0
    %v201 = vadd.f32 0.0, %v200
    %v202 = vpop.f32.mrf.mxu0
    %203 = vdwg.mxu0
    %vm204 = vcmp.ne.f32.partialorder %v43, 0.0
    %vm205 = vcmp.ne.f32.partialorder %v44, 0.0
    %vm206 = vcmp.ne.f32.partialorder %v45, 0.0
    %vm207 = vcmp.ne.f32.partialorder %v46, 0.0
    %v208 = vsel %vm204, 1, 0
    %v209 = vsel %vm205, 1, 0
    %210 = vset.pattern.permute.xlu0 0
    %211 = vperm.xlu0 %210, %v208
    %v212 = vpop.permute.xlu0 %211
    %213 = vset.pattern.permute.xlu0 0
    %214 = vperm.xlu0 %213, %v209
    %v215 = vpop.permute.xlu0 %214
    %vm216 = vcmp.eq.s32.totalorder %v212, 1
    %vm217 = vcmp.eq.s32.totalorder %v215, 1
    %v218 = vsel %vm206, 1, 0
    %v219 = vsel %vm207, 1, 0
    %v220 = vlaneseq
    %v221 = vshrl.u32 %v220, 7
    %v222 = vsub.s32 0, %v221
    %v223 = vrot.slane %v218, %v222
    %v224 = vlaneseq
    %v225 = vshrl.u32 %v224, 7
    %v226 = vsub.s32 0, %v225
    %v227 = vrot.slane %v219, %v226
    %vm228 = vcmp.eq.s32.totalorder %v223, 1
    %vm229 = vcmp.eq.s32.totalorder %v227, 1
    %vm230 = vmand %vm216, %vm228
    %vm231 = vmand %vm217, %vm229
    %v232 = vsel %vm230, %v125, -10000.0
    %v233 = vsel %vm231, %v201, -10000.0
    %vm234 = vcmask 64512
    %v235 = vsel %vm234, %v232, -inf
    %236 = vmax.xlane.f32.xlu0 %v235
    %v237 = vpop.xlane.xlu0 %236
    %v238 = vsel %vm234, %v233, -inf
    %239 = vmax.xlane.f32.xlu0 %v238
    %v240 = vpop.xlane.xlu0 %239
    %v241 = vrot.slane %v237, 4
    %v242 = vmax.f32 %v237, %v241
    %v243 = vrot.slane %v242, 2
    %v244 = vmax.f32 %v242, %v243
    %v245 = vrot.slane %v244, 1
    %v246 = vmax.f32 %v244, %v245
    %v247 = vrot.slane %v240, 4
    %v248 = vmax.f32 %v240, %v247
    %v249 = vrot.slane %v248, 2
    %v250 = vmax.f32 %v248, %v249
    %v251 = vrot.slane %v250, 1
    %v252 = vmax.f32 %v250, %v251
    %v253 = vsub.f32 %v232, %v246
    %v254 = vsub.f32 %v233, %v252
    %v255 = vmul.f32 %v253, 1.442695
    %v256 = vpow.pop %v255
    %v257 = vmul.f32 %v254, 1.442695
    %v258 = vpow.pop %v257
    %v259 = vsel %vm234, %v256, 0.0
    %260 = vadd.xlane.f32.xlu0 %v259
    %v261 = vpop.xlane.xlu0 %260
    %v262 = vsel %vm234, %v258, 0.0
    %263 = vadd.xlane.f32.xlu0 %v262
    %v264 = vpop.xlane.xlu0 %263
    %v265 = vrot.slane %v259, 4
    %v266 = vadd.f32 %v259, %v265
    %v267 = vrot.slane %v266, 2
    %v268 = vadd.f32 %v266, %v267
    %v269 = vrot.slane %v268, 1
    %v270 = vadd.f32 %v268, %v269
    %v271 = vrot.slane %v262, 4
    %v272 = vadd.f32 %v262, %v271
    %v273 = vrot.slane %v272, 2
    %v274 = vadd.f32 %v272, %v273
    %v275 = vrot.slane %v274, 1
    %v276 = vadd.f32 %v274, %v275
    %v277 = vsel %vm230, 1, 0
    %v278 = vsel %vm231, 1, 0
    %v279 = vcvt.s32.f32 %v277
    %v280 = vcvt.s32.f32 %v278
    %v281 = vsel %vm234, %v279, -inf
    %282 = vmax.xlane.f32.xlu0 %v281
    %v283 = vpop.xlane.xlu0 %282
    %v284 = vsel %vm234, %v280, -inf
    %285 = vmax.xlane.f32.xlu0 %v284
    %v286 = vpop.xlane.xlu0 %285
    %vm287 = vcmp.gt.f32.partialorder %v283, 0.0
    %vm288 = vcmp.gt.f32.partialorder %v286, 0.0
    %v289 = vrot.slane %v281, 4
    %v290 = vmax.f32 %v281, %v289
    %v291 = vrot.slane %v290, 2
    %v292 = vmax.f32 %v290, %v291
    %v293 = vrot.slane %v292, 1
    %v294 = vmax.f32 %v292, %v293
    %v295 = vrot.slane %v284, 4
    %v296 = vmax.f32 %v284, %v295
    %v297 = vrot.slane %v296, 2
    %v298 = vmax.f32 %v296, %v297
    %v299 = vrot.slane %v298, 1
    %v300 = vmax.f32 %v298, %v299
    %vm301 = vcmp.gt.f32.partialorder %v294, 0.0
    %vm302 = vcmp.gt.f32.partialorder %v300, 0.0
    %v303 = vmax.f32 %v261, 1e-30
    %v304 = vmax.f32 %v264, 1e-30
    %v305 = vrcp.pop %v303
    %v306 = vrcp.pop %v304
    %v307 = vmax.f32 %v270, 1e-30
    %v308 = vmax.f32 %v276, 1e-30
    %v309 = vrcp.pop %v307
    %v310 = vrcp.pop %v308
    %v312 = vsel %vm234, %v256, 0
    %314 = vmatprep.subr.mxu0 0.0
    %315 = vmatpush1.msra.mxu0 0.0
    %316 = vmatprep.subr.mxu0 0.0
    %317 = vmatpush1.msra.mxu0 0.0
    %318 = vmatprep.subr.mxu0 0.0
    %319 = vmatpush1.msra.mxu0 0.0
    %320 = vmatprep.subr.mxu0 0.0
    %321 = vmatpush1.msra.mxu0 0.0
    %322 = vmatprep.subr.mxu0 0.0
    %323 = vmatpush1.msra.mxu0 0.0
    %324 = vmatprep.subr.mxu0 0.0
    %325 = vmatpush1.msra.mxu0 0.0
    %326 = vmatprep.subr.mxu0 0.0
    %327 = vmatpush1.msra.mxu0 0.0
    %328 = vmatprep.subr.mxu0 0.0
    %329 = vmatpush1.msra.mxu0 0.0
    %330 = vmatprep.subr.mxu0 0.0
    %331 = vmatpush1.msra.mxu0 0.0
    %332 = vmatprep.subr.mxu0 0.0
    %333 = vmatpush1.msra.mxu0 0.0
    %334 = vmatprep.subr.mxu0 0.0
    %335 = vmatpush1.msra.mxu0 0.0
    %336 = vmatprep.subr.mxu0 0.0
    %337 = vmatpush1.msra.mxu0 0.0
    %338 = vmatprep.subr.mxu0 0.0
    %339 = vmatpush1.msra.mxu0 0.0
    %340 = vmatprep.subr.mxu0 0.0
    %341 = vmatpush1.msra.mxu0 0.0
    %342 = vmatprep.subr.mxu0 0.0
    %343 = vmatpush1.msra.mxu0 0.0
    %344 = vmatprep.subr.mxu0 0.0
    %345 = vmatpush1.msra.mxu0 %v41
    %346 = vmatprep.subr.mxu0 0.0
    %347 = vmatpush2.msra.mxu0 0.0
    %348 = vmatprep.subr.mxu0 0.0
    %349 = vmatpush2.msra.mxu0 0.0
    %350 = vmatprep.subr.mxu0 0.0
    %351 = vmatpush2.msra.mxu0 0.0
    %352 = vmatprep.subr.mxu0 0.0
    %353 = vmatpush2.msra.mxu0 0.0
    %354 = vmatprep.subr.mxu0 0.0
    %355 = vmatpush2.msra.mxu0 0.0
    %356 = vmatprep.subr.mxu0 0.0
    %357 = vmatpush2.msra.mxu0 0.0
    %358 = vmatprep.subr.mxu0 0.0
    %359 = vmatpush2.msra.mxu0 0.0
    %360 = vmatprep.subr.mxu0 0.0
    %361 = vmatpush2.msra.mxu0 0.0
    %362 = vmatprep.subr.mxu0 0.0
    %363 = vmatpush2.msra.mxu0 0.0
    %364 = vmatprep.subr.mxu0 0.0
    %365 = vmatpush2.msra.mxu0 0.0
    %366 = vmatprep.subr.mxu0 0.0
    %367 = vmatpush2.msra.mxu0 0.0
    %368 = vmatprep.subr.mxu0 0.0
    %369 = vmatpush2.msra.mxu0 0.0
    %370 = vmatprep.subr.mxu0 0.0
    %371 = vmatpush2.msra.mxu0 0.0
    %372 = vmatprep.subr.mxu0 0.0
    %373 = vmatpush2.msra.mxu0 0.0
    %374 = vmatprep.subr.mxu0 0.0
    %375 = vmatpush2.msra.mxu0 0.0
    %376 = vmatprep.subr.mxu0 0.0
    %377 = vmatpush2.msra.mxu0 0.0
    %378 = vmatprep.mubr.f32.mxu0 0.0
    %379 = vmatmul.mubr.f32.gmra.mxu0 %v312
    %v380 = vpop.f32.mrf.mxu0
    %v381 = vadd.f32 0.0, %v380
    %v382 = vpop.f32.mrf.mxu0
    %383 = vdwg.mxu0
    %v385 = vsel %vm234, %v258, 0
    %387 = vmatprep.subr.mxu0 0.0
    %388 = vmatpush1.msra.mxu0 0.0
    %389 = vmatprep.subr.mxu0 0.0
    %390 = vmatpush1.msra.mxu0 0.0
    %391 = vmatprep.subr.mxu0 0.0
    %392 = vmatpush1.msra.mxu0 0.0
    %393 = vmatprep.subr.mxu0 0.0
    %394 = vmatpush1.msra.mxu0 0.0
    %395 = vmatprep.subr.mxu0 0.0
    %396 = vmatpush1.msra.mxu0 0.0
    %397 = vmatprep.subr.mxu0 0.0
    %398 = vmatpush1.msra.mxu0 0.0
    %399 = vmatprep.subr.mxu0 0.0
    %400 = vmatpush1.msra.mxu0 0.0
    %401 = vmatprep.subr.mxu0 0.0
    %402 = vmatpush1.msra.mxu0 0.0
    %403 = vmatprep.subr.mxu0 0.0
    %404 = vmatpush1.msra.mxu0 0.0
    %405 = vmatprep.subr.mxu0 0.0
    %406 = vmatpush1.msra.mxu0 0.0
    %407 = vmatprep.subr.mxu0 0.0
    %408 = vmatpush1.msra.mxu0 0.0
    %409 = vmatprep.subr.mxu0 0.0
    %410 = vmatpush1.msra.mxu0 0.0
    %411 = vmatprep.subr.mxu0 0.0
    %412 = vmatpush1.msra.mxu0 0.0
    %413 = vmatprep.subr.mxu0 0.0
    %414 = vmatpush1.msra.mxu0 0.0
    %415 = vmatprep.subr.mxu0 0.0
    %416 = vmatpush1.msra.mxu0 0.0
    %417 = vmatprep.subr.mxu0 0.0
    %418 = vmatpush1.msra.mxu0 %v42
    %419 = vmatprep.subr.mxu0 0.0
    %420 = vmatpush2.msra.mxu0 0.0
    %421 = vmatprep.subr.mxu0 0.0
    %422 = vmatpush2.msra.mxu0 0.0
    %423 = vmatprep.subr.mxu0 0.0
    %424 = vmatpush2.msra.mxu0 0.0
    %425 = vmatprep.subr.mxu0 0.0
    %426 = vmatpush2.msra.mxu0 0.0
    %427 = vmatprep.subr.mxu0 0.0
    %428 = vmatpush2.msra.mxu0 0.0
    %429 = vmatprep.subr.mxu0 0.0
    %430 = vmatpush2.msra.mxu0 0.0
    %431 = vmatprep.subr.mxu0 0.0
    %432 = vmatpush2.msra.mxu0 0.0
    %433 = vmatprep.subr.mxu0 0.0
    %434 = vmatpush2.msra.mxu0 0.0
    %435 = vmatprep.subr.mxu0 0.0
    %436 = vmatpush2.msra.mxu0 0.0
    %437 = vmatprep.subr.mxu0 0.0
    %438 = vmatpush2.msra.mxu0 0.0
    %439 = vmatprep.subr.mxu0 0.0
    %440 = vmatpush2.msra.mxu0 0.0
    %441 = vmatprep.subr.mxu0 0.0
    %442 = vmatpush2.msra.mxu0 0.0
    %443 = vmatprep.subr.mxu0 0.0
    %444 = vmatpush2.msra.mxu0 0.0
    %445 = vmatprep.subr.mxu0 0.0
    %446 = vmatpush2.msra.mxu0 0.0
    %447 = vmatprep.subr.mxu0 0.0
    %448 = vmatpush2.msra.mxu0 0.0
    %449 = vmatprep.subr.mxu0 0.0
    %450 = vmatpush2.msra.mxu0 0.0
    %451 = vmatprep.mubr.f32.mxu0 0.0
    %452 = vmatmul.mubr.f32.gmra.mxu0 %v385
    %v453 = vpop.f32.mrf.mxu0
    %v454 = vadd.f32 0.0, %v453
    %v455 = vpop.f32.mrf.mxu0
    %456 = vdwg.mxu0
    %v457 = vsel %vm51, %v41, 0.0
    %v458 = vrot.slane %v457, 4
    %v459 = vadd.f32 %v457, %v458
    %v460 = vrot.slane %v459, 2
    %v461 = vadd.f32 %v459, %v460
    %v462 = vrot.slane %v461, 1
    %v463 = vadd.f32 %v461, %v462
    %v464 = vsel %vm51, %v42, 0.0
    %v465 = vrot.slane %v464, 4
    %v466 = vadd.f32 %v464, %v465
    %v467 = vrot.slane %v466, 2
    %v468 = vadd.f32 %v466, %v467
    %v469 = vrot.slane %v468, 1
    %v470 = vadd.f32 %v468, %v469
    %v471 = vrcp.pop 8.0
    %v472 = vmul.f32 %v463, %v471
    %v473 = vmul.f32 %v470, %v471
    %v474 = vmul.f32 %v381, %v305
    %v475 = vmul.f32 %v454, %v306
    %v476 = vsel %vm287, 1, 0
    %v477 = vsel %vm288, 1, 0
    %vm478 = vcmp.eq.s32.totalorder %v476, 1
    %vm479 = vcmp.eq.s32.totalorder %v477, 1
    %v480 = vsel %vm478, %v474, %v472
    %v481 = vsel %vm479, %v475, %v473
    %482 = vst.msk [vmem:[#allocation6] sm:$0xff] %vm51, %v480
    %483 = vst.msk [vmem:[#allocation6 + $0x8] sm:$0xff] %vm51, %v481
    %v484 = vmul.f32 %v256, %v309
    %v485 = vmul.f32 %v258, %v310
    %v486 = vsel %vm301, 1, 0
    %v487 = vsel %vm302, 1, 0
    %vm488 = vcmp.eq.s32.totalorder %v486, 1
    %vm489 = vcmp.eq.s32.totalorder %v487, 1
    %v490 = vsel %vm488, %v484, 0.125
    %v491 = vsel %vm489, %v485, 0.125
    %v493 = vsel %vm234, %v490, 0
    %495 = vmatprep.subr.mxu0 0.0
    %496 = vmatpush1.msra.mxu0 0.0
    %497 = vmatprep.subr.mxu0 0.0
    %498 = vmatpush1.msra.mxu0 0.0
    %499 = vmatprep.subr.mxu0 0.0
    %500 = vmatpush1.msra.mxu0 0.0
    %501 = vmatprep.subr.mxu0 0.0
    %502 = vmatpush1.msra.mxu0 0.0
    %503 = vmatprep.subr.mxu0 0.0
    %504 = vmatpush1.msra.mxu0 0.0
    %505 = vmatprep.subr.mxu0 0.0
    %506 = vmatpush1.msra.mxu0 0.0
    %507 = vmatprep.subr.mxu0 0.0
    %508 = vmatpush1.msra.mxu0 0.0
    %509 = vmatprep.subr.mxu0 0.0
    %510 = vmatpush1.msra.mxu0 0.0
    %511 = vmatprep.subr.mxu0 0.0
    %512 = vmatpush1.msra.mxu0 0.0
    %513 = vmatprep.subr.mxu0 0.0
    %514 = vmatpush1.msra.mxu0 0.0
    %515 = vmatprep.subr.mxu0 0.0
    %516 = vmatpush1.msra.mxu0 0.0
    %517 = vmatprep.subr.mxu0 0.0
    %518 = vmatpush1.msra.mxu0 0.0
    %519 = vmatprep.subr.mxu0 0.0
    %520 = vmatpush1.msra.mxu0 0.0
    %521 = vmatprep.subr.mxu0 0.0
    %522 = vmatpush1.msra.mxu0 0.0
    %523 = vmatprep.subr.mxu0 0.0
    %524 = vmatpush1.msra.mxu0 0.0
    %525 = vmatprep.subr.mxu0 0.0
    %526 = vmatpush1.msra.mxu0 %v39
    %527 = vmatprep.subr.mxu0 0.0
    %528 = vmatpush2.msra.mxu0 0.0
    %529 = vmatprep.subr.mxu0 0.0
    %530 = vmatpush2.msra.mxu0 0.0
    %531 = vmatprep.subr.mxu0 0.0
    %532 = vmatpush2.msra.mxu0 0.0
    %533 = vmatprep.subr.mxu0 0.0
    %534 = vmatpush2.msra.mxu0 0.0
    %535 = vmatprep.subr.mxu0 0.0
    %536 = vmatpush2.msra.mxu0 0.0
    %537 = vmatprep.subr.mxu0 0.0
    %538 = vmatpush2.msra.mxu0 0.0
    %539 = vmatprep.subr.mxu0 0.0
    %540 = vmatpush2.msra.mxu0 0.0
    %541 = vmatprep.subr.mxu0 0.0
    %542 = vmatpush2.msra.mxu0 0.0
    %543 = vmatprep.subr.mxu0 0.0
    %544 = vmatpush2.msra.mxu0 0.0
    %545 = vmatprep.subr.mxu0 0.0
    %546 = vmatpush2.msra.mxu0 0.0
    %547 = vmatprep.subr.mxu0 0.0
    %548 = vmatpush2.msra.mxu0 0.0
    %549 = vmatprep.subr.mxu0 0.0
    %550 = vmatpush2.msra.mxu0 0.0
    %551 = vmatprep.subr.mxu0 0.0
    %552 = vmatpush2.msra.mxu0 0.0
    %553 = vmatprep.subr.mxu0 0.0
    %554 = vmatpush2.msra.mxu0 0.0
    %555 = vmatprep.subr.mxu0 0.0
    %556 = vmatpush2.msra.mxu0 0.0
    %557 = vmatprep.subr.mxu0 0.0
    %558 = vmatpush2.msra.mxu0 0.0
    %559 = vmatprep.mubr.f32.mxu0 0.0
    %560 = vmatmul.mubr.f32.gmra.mxu0 %v493
    %v561 = vpop.f32.mrf.mxu0
    %v562 = vadd.f32 0.0, %v561
    %v563 = vpop.f32.mrf.mxu0
    %564 = vdwg.mxu0
    %v566 = vsel %vm234, %v491, 0
    %568 = vmatprep.subr.mxu0 0.0
    %569 = vmatpush1.msra.mxu0 0.0
    %570 = vmatprep.subr.mxu0 0.0
    %571 = vmatpush1.msra.mxu0 0.0
    %572 = vmatprep.subr.mxu0 0.0
    %573 = vmatpush1.msra.mxu0 0.0
    %574 = vmatprep.subr.mxu0 0.0
    %575 = vmatpush1.msra.mxu0 0.0
    %576 = vmatprep.subr.mxu0 0.0
    %577 = vmatpush1.msra.mxu0 0.0
    %578 = vmatprep.subr.mxu0 0.0
    %579 = vmatpush1.msra.mxu0 0.0
    %580 = vmatprep.subr.mxu0 0.0
    %581 = vmatpush1.msra.mxu0 0.0
    %582 = vmatprep.subr.mxu0 0.0
    %583 = vmatpush1.msra.mxu0 0.0
    %584 = vmatprep.subr.mxu0 0.0
    %585 = vmatpush1.msra.mxu0 0.0
    %586 = vmatprep.subr.mxu0 0.0
    %587 = vmatpush1.msra.mxu0 0.0
    %588 = vmatprep.subr.mxu0 0.0
    %589 = vmatpush1.msra.mxu0 0.0
    %590 = vmatprep.subr.mxu0 0.0
    %591 = vmatpush1.msra.mxu0 0.0
    %592 = vmatprep.subr.mxu0 0.0
    %593 = vmatpush1.msra.mxu0 0.0
    %594 = vmatprep.subr.mxu0 0.0
    %595 = vmatpush1.msra.mxu0 0.0
    %596 = vmatprep.subr.mxu0 0.0
    %597 = vmatpush1.msra.mxu0 0.0
    %598 = vmatprep.subr.mxu0 0.0
    %599 = vmatpush1.msra.mxu0 %v40
    %600 = vmatprep.subr.mxu0 0.0
    %601 = vmatpush2.msra.mxu0 0.0
    %602 = vmatprep.subr.mxu0 0.0
    %603 = vmatpush2.msra.mxu0 0.0
    %604 = vmatprep.subr.mxu0 0.0
    %605 = vmatpush2.msra.mxu0 0.0
    %606 = vmatprep.subr.mxu0 0.0
    %607 = vmatpush2.msra.mxu0 0.0
    %608 = vmatprep.subr.mxu0 0.0
    %609 = vmatpush2.msra.mxu0 0.0
    %610 = vmatprep.subr.mxu0 0.0
    %611 = vmatpush2.msra.mxu0 0.0
    %612 = vmatprep.subr.mxu0 0.0
    %613 = vmatpush2.msra.mxu0 0.0
    %614 = vmatprep.subr.mxu0 0.0
    %615 = vmatpush2.msra.mxu0 0.0
    %616 = vmatprep.subr.mxu0 0.0
    %617 = vmatpush2.msra.mxu0 0.0
    %618 = vmatprep.subr.mxu0 0.0
    %619 = vmatpush2.msra.mxu0 0.0
    %620 = vmatprep.subr.mxu0 0.0
    %621 = vmatpush2.msra.mxu0 0.0
    %622 = vmatprep.subr.mxu0 0.0
    %623 = vmatpush2.msra.mxu0 0.0
    %624 = vmatprep.subr.mxu0 0.0
    %625 = vmatpush2.msra.mxu0 0.0
    %626 = vmatprep.subr.mxu0 0.0
    %627 = vmatpush2.msra.mxu0 0.0
    %628 = vmatprep.subr.mxu0 0.0
    %629 = vmatpush2.msra.mxu0 0.0
    %630 = vmatprep.subr.mxu0 0.0
    %631 = vmatpush2.msra.mxu0 0.0
    %632 = vmatprep.mubr.f32.mxu0 0.0
    %633 = vmatmul.mubr.f32.gmra.mxu0 %v566
    %v634 = vpop.f32.mrf.mxu0
    %v635 = vadd.f32 0.0, %v634
    %v636 = vpop.f32.mrf.mxu0
    %637 = vdwg.mxu0
    %638 = vst.msk [vmem:[#allocation7] sm:$0xff] %vm51, %v562
    %639 = vst.msk [vmem:[#allocation7 + $0x8] sm:$0xff] %vm51, %v635
    // Predicated region
    $region26: #{tpu_custom_call.1} parent=1 // pred_check
      _
    $region27: #{tpu_custom_call.1} parent=1 // pred_check_branch
      %641 = sbr.rel (0) target = $region29
    $region28: #{tpu_custom_call.1} parent=1 // pred_region
      %s643 = ssub.s32 256, 256
      %644 = vsyncadd [#allocation5], %s643
      %s645 = sshll.u32 [#allocation6], 4
      %s646 = int_to_ptr.vmem [resolvable:$true] %s645
      %651 = dma.vmem_to_hbm [thread:$0]  %s646, 256, %s5, [#allocation5], 128, 128, 8
    $region29: #{tpu_custom_call.1} parent=1 // pred_fallthru
      _
    // Predicated region
    $region30: #{tpu_custom_call.1} parent=1 // pred_check
      _
    $region31: #{tpu_custom_call.1} parent=1 // pred_check_branch
      %653 = sbr.rel (0) target = $region33
    $region32: #{tpu_custom_call.1} parent=1 // pred_region
      %s655 = ssub.s32 256, 256
      %656 = vsyncadd [#allocation8], %s655
      %s657 = sshll.u32 [#allocation7], 4
      %s658 = int_to_ptr.vmem [resolvable:$true] %s657
      %663 = dma.vmem_to_hbm [thread:$0]  %s658, 256, %s6, [#allocation8], 128, 128, 8
    $region33: #{tpu_custom_call.1} parent=1 // pred_fallthru
      _
    // Predicated region
    $region34: #{tpu_custom_call.1} parent=1 // pred_check
      _
    $region35: #{tpu_custom_call.1} parent=1 // pred_check_branch
      %665 = sbr.rel (0) target = $region37
    $region36: #{tpu_custom_call.1} parent=1 // pred_region
      %666 = dma.done [#allocation5], 256
    $region37: #{tpu_custom_call.1} parent=1 // pred_fallthru
      _
    // Predicated region
    $region38: #{tpu_custom_call.1} parent=1 // pred_check
      _
    $region39: #{tpu_custom_call.1} parent=1 // pred_check_branch
      %668 = sbr.rel (0) target = $region41
    $region40: #{tpu_custom_call.1} parent=1 // pred_region
      %669 = dma.done [#allocation8], 256
    $region41: #{tpu_custom_call.1} parent=1 // pred_fallthru
      _
    %670 = vsyncpa [#allocation4], 1
    %671 = vsyncpa [#allocation5], 1
    %672 = vsyncpa [#allocation8], 1

</llo_original>
